<compile_context>
chip_gen: v6e
topology: v6e:2x2x1
jax: 0.10.0
libtpu: 0.0.40
codegen_flags: <defaults>
</compile_context>

<pallas_src>
import jax
import jax.numpy as jnp
from jax.experimental import pallas as pl
from jax.experimental.pallas import tpu as pltpu


def _vmem_capacity_bytes():
    try:
        cap = int(getattr(pltpu.get_tpu_info(), "vmem_capacity_bytes"))
        return min(max(cap, 32 << 20), 128 << 20)
    except Exception:
        return 64 << 20            # conservative fallback (v7x per-TensorCore)


_VMEM_CAP = _vmem_capacity_bytes()
# Per-grid-step input slab target: ~1/10 of VMEM (v5e/v6e ~12.8 MiB, v7x
# ~6.4 MiB).  Peak kernel VMEM ~= 2x slab (double-buffered input) + 1x slab
# (prefix-sum scratch) + ~1-2x slab transients, well inside the limit below.
_CHUNK_BYTES = max(1 << 20, _VMEM_CAP // 10)


def _bsl_kernel(h_ref, o_ref, s_ref):
    # h_ref: (1, Bt, HW) = heatmap j of every batch row in this chunk.
    # o_ref: (Bt, 1) per-batch loss accumulator (resident across the j axis).
    # s_ref: (Bt, HW) VMEM scratch: per-pixel prefix sum over heatmaps k < j.
    j = pl.program_id(1)

    @pl.when(j == 0)
    def _():
        s_ref[...] = jnp.zeros_like(s_ref)
        o_ref[...] = jnp.zeros_like(o_ref)

    h = h_ref[0]                                        # (Bt, HW)
    m = jnp.min(h, axis=1, keepdims=True)               # (Bt, 1)
    mx = jnp.max(h, axis=1, keepdims=True)              # (Bt, 1)
    # Reciprocal only on the tiny (Bt, 1) denominator; the full-tile op stream
    # stays sub/mul only.
    inv = pl.reciprocal(mx - m + 1e-8, approx=False)
    hn = (h - m) * inv                                  # (Bt, HW)

    # Strict-lower-triangle cross-overlap via prefix sums (no cancellation):
    #   loss_b = sum_j <hn_j, sum_{k<j} hn_k>
    o_ref[...] += jnp.sum(hn * s_ref[...], axis=1, keepdims=True)
    s_ref[...] = s_ref[...] + hn


def _pick_bt(B, hw):
    """Batch-chunk size: multiple of 8 (or == B), sized to the slab budget."""
    cap = max(1, _CHUNK_BYTES // (hw * 4))
    if cap >= B:
        bt = B
    elif cap >= 8:
        bt = (cap // 8) * 8
    else:
        bt = min(B, 8)   # very large heatmaps: keep sublanes dense anyway
    # Prefer >= 2 batch chunks so the "parallel" axis can shard across v7x's
    # two TensorCores (no effect on single-TC v5e/v6e); keep Bt a multiple of 8
    # so the partial last block still has dense sublane tiles.
    if bt == B and B >= 16:
        half = -(-B // 2)                 # ceil(B / 2)
        half = -(-half // 8) * 8          # round up to a multiple of 8
        if half < B:
            bt = half
    return bt


@jax.jit
def batch_separation_loss(heatmaps):
    """heatmaps: (B, N, H, W) -> scalar float32 loss (mean over batch)."""
    B, N, H, W = heatmaps.shape
    hw = H * W

    # Layout plumbing: heatmap index leading, batch as the sublane axis,
    # flattened spatial as the lane axis.
    ht = jnp.transpose(heatmaps.astype(jnp.float32).reshape(B, N, hw),
                       (1, 0, 2))                       # (N, B, HW)

    bt = _pick_bt(B, hw)
    num_chunks = pl.cdiv(B, bt)
    slab = bt * hw * 4
    vmem_limit = int(min(_VMEM_CAP * 3 // 4,
                         max(32 << 20, 6 * slab + (2 << 20))))

    per_batch = pl.pallas_call(
        _bsl_kernel,
        out_shape=jax.ShapeDtypeStruct((B, 1), jnp.float32),
        grid=(num_chunks, N),                           # reduction axis last
        in_specs=[pl.BlockSpec((1, bt, hw), lambda b, j: (j, b, 0))],
        out_specs=pl.BlockSpec((bt, 1), lambda b, j: (b, 0)),
        scratch_shapes=[pltpu.VMEM((bt, hw), jnp.float32)],
        compiler_params=pltpu.CompilerParams(
            dimension_semantics=("parallel", "arbitrary"),
            vmem_limit_bytes=vmem_limit),
    )(ht)

    return jnp.sum(per_batch) / B


def _reference_loss(heatmaps):
    """Pure-JAX reference mirroring the PyTorch module."""
    B = heatmaps.shape[0]
    total = 0.0
    for i in range(B):
        h = heatmaps[i]                                        # (N, H, W)
        mins = jnp.min(h, axis=(1, 2), keepdims=True)
        maxs = jnp.max(h, axis=(1, 2), keepdims=True)
        hn = (h - mins) / (maxs - mins + 1e-8)
        ov = hn[:, None] * hn[None, :]                         # (N, N, H, W)
        n = hn.shape[0]
        r = jnp.arange(n)[:, None]
        c = jnp.arange(n)[None, :]
        mask = (r > c).astype(hn.dtype)[:, :, None, None]
        total = total + jnp.sum(ov * mask)
    return total / B


if __name__ == "__main__":
    key = jax.random.PRNGKey(0)
    B, N, H, W = 2, 4, 16, 16
    x = jax.random.uniform(key, (B, N, H, W), dtype=jnp.float32)

    loss = batch_separation_loss(x)
    jax.block_until_ready(loss)

    ref = _reference_loss(x)
    assert jnp.allclose(loss, ref, rtol=1e-5, atol=1e-5), (loss, ref)

    print("KERNEL_OK")
</pallas_src>

<mosaic_0001>
module attributes {stable_mosaic.version = 11 : i64} {
  func.func @_bsl_kernel(%arg0: i32, %arg1: i32, %arg2: memref<1x2x256xf32, #tpu.memory_space<vmem>>, %arg3: memref<2x1xf32, #tpu.memory_space<vmem>>, %arg4: memref<2x256xf32, #tpu.memory_space<vmem>>) attributes {dimension_semantics = [#tpu.dimension_semantics<parallel>, #tpu.dimension_semantics<arbitrary>], iteration_bounds = array<i64: 1, 4>, scalar_prefetch = 0 : i64, scratch_operands = 1 : i64, tpu.core_type = #tpu.core_type<tc>, window_params = [{transform_indices = @transform_0, window_bounds = array<i64: 1, 2, 256>}, {transform_indices = @transform_1, window_bounds = array<i64: 2, 1>}]} {
    %c0_i32 = arith.constant 0 : i32
    %0 = arith.cmpi eq, %arg1, %c0_i32 : i32
    %1 = arith.extui %0 : i1 to i32
    %c0_i32_0 = arith.constant 0 : i32
    %2 = arith.cmpi ne, %1, %c0_i32_0 : i32
    scf.if %2 {
      %cst_16 = arith.constant 0.000000e+00 : f32
      %27 = vector.broadcast %cst_16 : f32 to vector<2x256xf32>
      %c0_17 = arith.constant 0 : index
      %c0_18 = arith.constant 0 : index
      %28 = vector.load %arg4[%c0_17, %c0_18] : memref<2x256xf32, #tpu.memory_space<vmem>>, vector<2x256xf32>
      tpu.vector_store %arg4[%c0_17, %c0_18], %27 {strides = array<i32>} : memref<2x256xf32, #tpu.memory_space<vmem>>, vector<2x256xf32>,
      %cst_19 = arith.constant 0.000000e+00 : f32
      %29 = vector.broadcast %cst_19 : f32 to vector<2x1xf32>
      %c0_20 = arith.constant 0 : index
      %c0_21 = arith.constant 0 : index
      %30 = vector.load %arg3[%c0_20, %c0_21] : memref<2x1xf32, #tpu.memory_space<vmem>>, vector<2x1xf32>
      tpu.vector_store %arg3[%c0_20, %c0_21], %29 {strides = array<i32>} : memref<2x1xf32, #tpu.memory_space<vmem>>, vector<2x1xf32>,
    } else {
    }
    %c0 = arith.constant 0 : index
    %c0_1 = arith.constant 0 : index
    %c0_2 = arith.constant 0 : index
    %3 = vector.load %arg2[%c0, %c0_1, %c0_2] : memref<1x2x256xf32, #tpu.memory_space<vmem>>, vector<1x2x256xf32>
    %4 = vector.shape_cast %3 : vector<1x2x256xf32> to vector<2x256xf32>
    %cst = arith.constant dense<0x7F800000> : vector<2xf32>
    %5 = vector.multi_reduction <minimumf>, %4, %cst [1] : vector<2x256xf32> to vector<2xf32>
    %6 = vector.shape_cast %5 : vector<2xf32> to vector<2x1xf32>
    %cst_3 = arith.constant dense<0xFF800000> : vector<2xf32>
    %7 = vector.multi_reduction <maximumf>, %4, %cst_3 [1] : vector<2x256xf32> to vector<2xf32>
    %8 = vector.shape_cast %7 : vector<2xf32> to vector<2x1xf32>
    %9 = arith.subf %8, %6 : vector<2x1xf32>
    %cst_4 = arith.constant 9.99999993E-9 : f32
    %10 = vector.broadcast %cst_4 : f32 to vector<2x1xf32>
    %11 = arith.addf %9, %10 : vector<2x1xf32>
    %12 = tpu.reciprocal %11 : vector<2x1xf32> -> vector<2x1xf32>
    %13 = vector.broadcast %6 : vector<2x1xf32> to vector<2x256xf32>
    %14 = arith.subf %4, %13 : vector<2x256xf32>
    %15 = vector.broadcast %12 : vector<2x1xf32> to vector<2x256xf32>
    %16 = arith.mulf %14, %15 : vector<2x256xf32>
    %c0_5 = arith.constant 0 : index
    %c0_6 = arith.constant 0 : index
    %17 = vector.load %arg3[%c0_5, %c0_6] : memref<2x1xf32, #tpu.memory_space<vmem>>, vector<2x1xf32>
    %c0_7 = arith.constant 0 : index
    %c0_8 = arith.constant 0 : index
    %18 = vector.load %arg4[%c0_7, %c0_8] : memref<2x256xf32, #tpu.memory_space<vmem>>, vector<2x256xf32>
    %19 = arith.mulf %16, %18 : vector<2x256xf32>
    %cst_9 = arith.constant dense<0.000000e+00> : vector<2xf32>
    %20 = vector.multi_reduction <add>, %19, %cst_9 [1] : vector<2x256xf32> to vector<2xf32>
    %21 = vector.shape_cast %20 : vector<2xf32> to vector<2x1xf32>
    %22 = arith.addf %17, %21 : vector<2x1xf32>
    %c0_10 = arith.constant 0 : index
    %c0_11 = arith.constant 0 : index
    %23 = vector.load %arg3[%c0_10, %c0_11] : memref<2x1xf32, #tpu.memory_space<vmem>>, vector<2x1xf32>
    tpu.vector_store %arg3[%c0_10, %c0_11], %22 {strides = array<i32>} : memref<2x1xf32, #tpu.memory_space<vmem>>, vector<2x1xf32>,
    %c0_12 = arith.constant 0 : index
    %c0_13 = arith.constant 0 : index
    %24 = vector.load %arg4[%c0_12, %c0_13] : memref<2x256xf32, #tpu.memory_space<vmem>>, vector<2x256xf32>
    %25 = arith.addf %24, %16 : vector<2x256xf32>
    %c0_14 = arith.constant 0 : index
    %c0_15 = arith.constant 0 : index
    %26 = vector.load %arg4[%c0_14, %c0_15] : memref<2x256xf32, #tpu.memory_space<vmem>>, vector<2x256xf32>
    tpu.vector_store %arg4[%c0_14, %c0_15], %25 {strides = array<i32>} : memref<2x256xf32, #tpu.memory_space<vmem>>, vector<2x256xf32>,
    return
  }
  func.func @transform_0(%arg0: i32, %arg1: i32) -> (i32, i32, i32) {
    %c0_i32 = arith.constant 0 : i32
    %c0_i32_0 = arith.constant 0 : i32
    return %arg1, %arg0, %c0_i32 : i32, i32, i32
  }
  func.func @transform_1(%arg0: i32, %arg1: i32) -> (i32, i32) {
    %c0_i32 = arith.constant 0 : i32
    %c0_i32_0 = arith.constant 0 : i32
    return %arg0, %c0_i32 : i32, i32
  }
}

</mosaic_0001>

<llo_original>
// kernel: batch_separation_loss.1
$region0: #{batch_separation_loss.1}
  #allocation0 [shape = 'u32[]', space=smem, size = 0x4, offset = 0x4, fixed_abs, tag = 'smem constant byte address 0x4 - core index']
  #allocation1 [shape = 'u32[144,128]{1,0:T(1,128)}', space=vmem, size = 0x12000, scoped, tag = 'internal scratch']
  #allocation2 [shape = 'f32[2,256]{1,0:T(2,128)}', space=vmem, size = 0x800, scoped, tag = 'scratch operand']
  %s0 = inlined_call_operand.vmem [shape: f32[4,2,256], index: 0, kind: input, shape index: {}]
  %s1 = inlined_call_operand.vmem [shape: f32[2,1], index: 1, kind: output, shape index: {}]
  %s2 = sld [smem:[#allocation0]]
  $region41: #{batch_separation_loss.1} parent=0
    _
  %s4 = ssub.s32 1, %s2
  %s5 = scalar_select 0, %s4, %s2
  loop: start=0, step=1, limit=6
  $region2: #{batch_separation_loss.1} parent=0 // loop_pre_header
    _
  $region3: #{batch_separation_loss.1} parent=0 // loop_header
    %s7 = sphi 0, %s11
    %p8 = scmp.ge.s32.totalorder %s7, 6
    %s14 = sphi 0, %s26
    %s15 = sphi 0, %s22
    %s16 = sphi 0, %s14
    %s17 = sphi 0, %s15
    %s18 = sphi 0, %s16
    %s19 = sphi 0, %s17
    %s31 = sphi 0, %s33
    %s34 = sphi 0, %s31
    %s35 = sphi 0, %s34
    %s51 = sphi 0, %s35
    %s57 = sphi 0, %s59
    %s60 = sphi 0, %s57
    %s61 = sphi 0, %s60
    %s77 = sphi 0, %s61
  $region4: #{batch_separation_loss.1} parent=0 // loop_header_branch
    %10 = sbr.rel (%p8) target = $region8
  $region5: #{batch_separation_loss.1} parent=0 // loop_body
    %s12 = ssub.s32 %s7, 1
    %s13 = ssub.s32 %s7, 2
    %s20 = sadd.s32 1, %s15
    %p21 = scmp.ge.s32.totalorder %s20, 4
    %s22 = scalar_select %p21, 0, %s20
    %s23 = sadd.s32 1, %s14
    %s24 = scalar_select %p21, %s23, %s14
    %p25 = scmp.ge.s32.totalorder %s24, 1
    %s26 = scalar_select %p25, 0, %s24
    %s27 = ssub.s32 %s15, %s22
    %s28 = ssub.s32 %s14, %s26
    %s29 = sor.u32 %s27, %s28
    %p30 = scmp.eq.s32.totalorder %s29, 0
    %s32 = sadd.s32 %s31, 1
    %s33 = scalar_select %p30, %s31, %s32
    %p36 = pneg %p30
    %p37 = scmp.eq.s32.totalorder %s7, 3
    %p38 = por %p36, %p37
    %p39 = scmp.ne.s32.totalorder %s31, %s34
    %p40 = scmp.eq.s32.totalorder %s7, 0
    %p41 = por %p39, %p40
    %p42 = scmp.ne.s32.totalorder %s31, %s34
    %p43 = scmp.eq.s32.totalorder %s12, 3
    %p44 = por %p42, %p43
    %p45 = scmp.ne.s32.totalorder %s34, %s35
    %p46 = scmp.eq.s32.totalorder %s12, 0
    %p47 = por %p45, %p46
    %p48 = scmp.ne.s32.totalorder %s34, %s35
    %p49 = scmp.eq.s32.totalorder %s13, 3
    %p50 = por %p48, %p49
    %p52 = scmp.ne.s32.totalorder %s35, %s51
    %p53 = scmp.eq.s32.totalorder %s13, 0
    %p54 = por %p52, %p53
    %s55 = ssub.s32 %s14, %s26
    %p56 = scmp.eq.s32.totalorder %s55, 0
    %s58 = sadd.s32 %s57, 1
    %s59 = scalar_select %p56, %s57, %s58
    %p62 = pneg %p56
    %p63 = scmp.eq.s32.totalorder %s7, 3
    %p64 = por %p62, %p63
    %p65 = scmp.ne.s32.totalorder %s57, %s60
    %p66 = scmp.eq.s32.totalorder %s7, 0
    %p67 = por %p65, %p66
    %p68 = scmp.ne.s32.totalorder %s57, %s60
    %p69 = scmp.eq.s32.totalorder %s12, 3
    %p70 = por %p68, %p69
    %p71 = scmp.ne.s32.totalorder %s60, %s61
    %p72 = scmp.eq.s32.totalorder %s12, 0
    %p73 = por %p71, %p72
    %p74 = scmp.ne.s32.totalorder %s60, %s61
    %p75 = scmp.eq.s32.totalorder %s13, 3
    %p76 = por %p74, %p75
    %p78 = scmp.ne.s32.totalorder %s61, %s77
    %p79 = scmp.eq.s32.totalorder %s13, 0
    %p80 = por %p78, %p79
    %p81 = scmp.le.s32.totalorder 1, %s7
    %p82 = scmp.lt.s32.totalorder %s7, 5
    %p83 = pnand %p81, %p82
    %p84 = pneg %p83
    // Predicated region
    $region9: #{batch_separation_loss.1} parent=5 // pred_check
      _
    $region10: #{batch_separation_loss.1} parent=5 // pred_check_branch
      %86 = sbr.rel (%p83) target = $region12
    $region11: #{batch_separation_loss.1} parent=5 // pred_region
      %s87 = ssub.s32 %s7, 1
    $region12: #{batch_separation_loss.1} parent=5 // pred_fallthru
      _
    %p88 = scmp.lt.s32.totalorder %s7, 4
    // Predicated region
    $region13: #{batch_separation_loss.1} parent=5 // pred_check
      %p89 = pneg %p88
    $region14: #{batch_separation_loss.1} parent=5 // pred_check_branch
      %91 = sbr.rel (%p89) target = $region16
    $region15: #{batch_separation_loss.1} parent=5 // pred_region
      // Predicated region
      $region17: #{batch_separation_loss.1} parent=15 // pred_check
        %p92 = pneg %p41
      $region18: #{batch_separation_loss.1} parent=15 // pred_check_branch
        %94 = sbr.rel (%p92) target = $region20
      $region19: #{batch_separation_loss.1} parent=15 // pred_region
        %p95 = scmp.lt.s32.totalorder %s15, 3
        %s96 = scalar_select %p95, %s15, 3
        %p97 = scmp.lt.s32.totalorder %s14, 0
        %s98 = scalar_select %p97, %s14, 0
        %s99 = smul.addr %s98, 2
        %s100 = smul.addr %s96, 2
        %s101 = sadd.s32 %s99, %s100
        %s102 = smul.addr %s101, 2
        %s103 = scalar_lea.vmem %s0, %s102
      $region20: #{batch_separation_loss.1} parent=15 // pred_fallthru
        _
    $region16: #{batch_separation_loss.1} parent=5 // pred_fallthru
      _
    %p104 = scmp.le.s32.totalorder 1, %s7
    %p105 = scmp.lt.s32.totalorder %s7, 5
    %p106 = pnand %p104, %p105
    %p107 = pneg %p106
    // Predicated region
    $region21: #{batch_separation_loss.1} parent=5 // pred_check
      _
    $region22: #{batch_separation_loss.1} parent=5 // pred_check_branch
      %109 = sbr.rel (%p106) target = $region24
    $region23: #{batch_separation_loss.1} parent=5 // pred_region
      %s110 = ssub.s32 %s7, 1
      %p111 = scmp.lt.s32.totalorder %s17, 3
      %s112 = scalar_select %p111, %s17, 3
      %p113 = scmp.lt.s32.totalorder %s16, 0
      %s114 = scalar_select %p113, %s16, 0
      %s115 = smul.addr %s114, 2
      %s116 = smul.addr %s112, 2
      %s117 = sadd.s32 %s115, %s116
      %s118 = smul.addr %s117, 2
      %s119 = scalar_lea.vmem %s0, %s118
      %p120 = pneg %p47
      %p121 = pneg %p44
      %p122 = pneg %p73
      %p123 = pneg %p70
      %p124 = scmp.lt.s32.totalorder %s16, 0
      %s125 = scalar_select %p124, %s16, 0
      %s126 = smul.addr %s125, 2
      %s127 = scalar_lea.vmem %s1, %s126
      %p128 = scmp.lt.s32.totalorder %s17, 3
      %s129 = scalar_select %p128, %s17, 3
      %p130 = scmp.lt.s32.totalorder %s16, 0
      %s131 = scalar_select %p130, %s16, 0
      %s132 = smul.addr %s131, 2
      %s133 = smul.addr %s129, 2
      %s134 = sadd.s32 %s132, %s133
      %s135 = smul.addr %s134, 2
      %s136 = scalar_lea.vmem %s0, %s135
      %p137 = scmp.lt.s32.totalorder %s16, 0
      %s138 = scalar_select %p137, %s16, 0
      %s139 = smul.addr %s138, 2
      %s140 = scalar_lea.vmem %s1, %s139
      %p141 = scmp.eq.s32.totalorder %s17, 0
      // Predicated region
      $region25: #{batch_separation_loss.1} parent=23 // pred_check
        %p142 = pneg %p141
      $region26: #{batch_separation_loss.1} parent=23 // pred_check_branch
        %144 = sbr.rel (%p142) target = $region28
      $region27: #{batch_separation_loss.1} parent=23 // pred_region
        %145 = vst [vmem:[#allocation2] sm:$0xf] 0.0
        %vm146 = vcmask 1024
        %147 = vst.msk [vmem:[%s140] sm:$0x3] %vm146, 0.0
      $region28: #{batch_separation_loss.1} parent=23 // pred_fallthru
        _
      %v148 = vld [vmem:[%s136] sm:$0xf]
      %v151 = vunpack.c.l.s4 1983009808
      %v152 = vunpack.c.0.s8 %v151
      %v153 = vlaneseq
      %v154 = vshrl.u32 %v153, 7
      %v155 = vsub.s32 %v152, %v154
      %v156 = vrot.slane %v148, %v155
      %v157 = vcombine.high %v156, %v156
      %vm160 = vcmask 1041408
      %v161 = vsel %vm160, %v156, inf
      %v162 = vsel %vm160, %v157, inf
      %v163 = vmin.f32 %v161, %v162
      %164 = vmin.xlane.f32.xlu0 %v163
      %v165 = vpop.xlane.xlu0 %164
      %v166 = vsel %vm160, %v156, -inf
      %v167 = vsel %vm160, %v157, -inf
      %v168 = vmax.f32 %v166, %v167
      %169 = vmax.xlane.f32.xlu0 %v168
      %v170 = vpop.xlane.xlu0 %169
      %v171 = vsub.f32 %v170, %v165
      %v172 = vadd.f32 %v171, 1e-08
      %v173 = vrcp.pop %v172
      %v176 = vunpack.c.l.s4 269488144
      %v177 = vunpack.c.0.s8 %v176
      %v178 = vlaneseq
      %v179 = vshrl.u32 %v178, 7
      %v180 = vsub.s32 %v177, %v179
      %v181 = vrot.slane %v165, %v180
      %v183 = vsub.f32 %v148, %v181
      %v186 = vunpack.c.l.s4 269488144
      %v187 = vunpack.c.0.s8 %v186
      %v188 = vlaneseq
      %v189 = vshrl.u32 %v188, 7
      %v190 = vsub.s32 %v187, %v189
      %v191 = vrot.slane %v173, %v190
      %v193 = vmul.f32 %v183, %v191
      %v194 = vld [vmem:[%s140] sm:$0x3]
      %v195 = vld [vmem:[#allocation2] sm:$0xf]
      %v196 = vmul.f32 %v193, %v195
      %v199 = vunpack.c.l.s4 1983009808
      %v200 = vunpack.c.0.s8 %v199
      %v201 = vlaneseq
      %v202 = vshrl.u32 %v201, 7
      %v203 = vsub.s32 %v200, %v202
      %v204 = vrot.slane %v196, %v203
      %v205 = vcombine.high %v204, %v204
      %v208 = vsel %vm160, %v204, 0.0
      %v209 = vsel %vm160, %v205, 0.0
      %v210 = vadd.f32 %v208, %v209
      %211 = vadd.xlane.f32.xlu0 %v210
      %v212 = vpop.xlane.xlu0 %211
      %v213 = vadd.f32 %v194, %v212
      %vm214 = vcmask 1024
      %215 = vst.msk [vmem:[%s140] sm:$0x3] %vm214, %v213
      %v216 = vld [vmem:[#allocation2] sm:$0xf]
      %v217 = vadd.f32 %v216, %v193
      %218 = vst [vmem:[#allocation2] sm:$0xf] %v217
      %p219 = scmp.lt.s32.totalorder %s16, 0
      %s220 = scalar_select %p219, %s16, 0
      %s221 = smul.addr %s220, 2
      %s222 = scalar_lea.vmem %s1, %s221
      // Predicated region
      $region29: #{batch_separation_loss.1} parent=23 // pred_check
        %p223 = pneg %p70
      $region30: #{batch_separation_loss.1} parent=23 // pred_check_branch
        %225 = sbr.rel (%p223) target = $region32
      $region31: #{batch_separation_loss.1} parent=23 // pred_region
        _
      $region32: #{batch_separation_loss.1} parent=23 // pred_fallthru
        _
      // Predicated region
      $region33: #{batch_separation_loss.1} parent=23 // pred_check
        %p226 = pneg %p70
      $region34: #{batch_separation_loss.1} parent=23 // pred_check_branch
        %228 = sbr.rel (%p226) target = $region36
      $region35: #{batch_separation_loss.1} parent=23 // pred_region
        %p229 = scmp.lt.s32.totalorder %s16, 0
        %s230 = scalar_select %p229, %s16, 0
        %s231 = smul.addr %s230, 2
        %s232 = scalar_lea.vmem %s1, %s231
      $region36: #{batch_separation_loss.1} parent=23 // pred_fallthru
        _
    $region24: #{batch_separation_loss.1} parent=5 // pred_fallthru
      _
    %p233 = scmp.le.s32.totalorder 2, %s7
    // Predicated region
    $region37: #{batch_separation_loss.1} parent=5 // pred_check
      %p234 = pneg %p233
    $region38: #{batch_separation_loss.1} parent=5 // pred_check_branch
      %236 = sbr.rel (%p234) target = $region40
    $region39: #{batch_separation_loss.1} parent=5 // pred_region
      %s237 = ssub.s32 %s7, 2
    $region40: #{batch_separation_loss.1} parent=5 // pred_fallthru
      _
  $region6: #{batch_separation_loss.1} parent=0 // loop_footer
    %s11 = sadd.s32 1, %s7
  $region7: #{batch_separation_loss.1} parent=0 // loop_footer_branch
    %6 = sbr.rel target = $region3
  $region8: #{batch_separation_loss.1} parent=0 // loop_exit
    _

</llo_original>
